<compile_context>
chip_gen: v7x
topology: tpu7x:2x2x1
jax: 0.10.0
libtpu: 0.0.40
codegen_flags: <defaults>
</compile_context>

<pallas_src>
import jax
import jax.numpy as jnp
from jax import lax
from jax.experimental import pallas as pl
from jax.experimental.pallas import tpu as pltpu

LANES = 128
SUBLANES = 8
_TILE_ELEMS = SUBLANES * LANES            # 1024: minimum alignment unit
_MAX_BLOCK_BYTES = 4 * 1024 * 1024        # HBM bytes per input per pipeline buffer
_VMEM_LIMIT_BYTES = 32 * 1024 * 1024      # 2 inputs x 2 buffers x 4 MiB + headroom


def _num_tensorcores() -> int:
    """Best-effort TensorCore count per device (1 on v5e/v6e, 2 on megacore/v7x)."""
    try:
        info = pltpu.get_tpu_info()
        for name in ("num_cores", "core_count", "num_tensorcores",
                     "tensorcore_count", "cores_per_chip"):
            v = getattr(info, name, None)
            if isinstance(v, int) and v > 0:
                return v
    except Exception:
        pass
    try:
        v = getattr(jax.devices()[0], "num_cores", None)
        if isinstance(v, int) and v > 0:
            return v
    except Exception:
        pass
    return 1


def _make_mse_kernel(block_rows: int, last_block: int, valid_rows: int,
                     needs_tail_mask: bool, needs_dup_skip: bool):
    """All arguments are shape-derived Python statics (no extra recompiles)."""

    def kernel(pred_ref, target_ref, out_ref):
        i = pl.program_id(1)

        @pl.when(i == 0)
        def _init():
            out_ref[...] = jnp.zeros_like(out_ref)

        logical_block = pl.program_id(0) * pl.num_programs(1) + i

        def _accum(masked: bool):
            d = (pred_ref[...].astype(jnp.float32)
                 - target_ref[...].astype(jnp.float32))
            dd = d * d
            if masked:
                # Only the partial last block is masked. Pallas pads the
                # overhanging rows with garbage reads; select 0.0 (never a
                # multiply-by-mask) so NaN/Inf garbage cannot leak.
                # Note: int32 row math; fine for any realistic array size.
                row_idx = (logical_block * block_rows
                           + lax.broadcasted_iota(jnp.int32, dd.shape, 0))
                dd = jnp.where(row_idx < valid_rows, dd, 0.0)
            # Lane-resident accumulation: reduce only the leading vreg-tile
            # axis (pure VPU adds); the tiny cross-lane reduce happens once in
            # the wrapper.
            out_ref[...] += jnp.sum(
                dd.reshape(block_rows // SUBLANES, SUBLANES, LANES), axis=0)

        if needs_tail_mask:
            # Interior blocks unmasked; last block masked; clamped duplicate
            # blocks (logical_block > last_block) skipped entirely.
            @pl.when(logical_block < last_block)
            def _interior():
                _accum(masked=False)

            @pl.when(logical_block == last_block)
            def _tail():
                _accum(masked=True)
        elif needs_dup_skip:
            @pl.when(logical_block <= last_block)
            def _body():
                _accum(masked=False)
        else:
            _accum(masked=False)

    return kernel


def mse_metric(pred: jax.Array, target: jax.Array) -> jax.Array:
    """Scalar MSE(pred, target), matching torch.nn.MSELoss()(pred, target)."""
    assert pred.shape == target.shape, "pred/target shapes must match"
    n = pred.size
    if n == 0:
        return jnp.float32(0.0)

    p = pred.reshape(-1)
    t = target.reshape(-1)

    # No full-array padding copies: the kernel streams the 1024-aligned prefix;
    # the (<1024 element) tail is reduced with plain jnp in the wrapper.
    n_main = (n // _TILE_ELEMS) * _TILE_ELEMS
    tail_sq = None
    if n_main != n:
        pt = p[n_main:].astype(jnp.float32)
        tt = t[n_main:].astype(jnp.float32)
        tail_sq = jnp.sum((pt - tt) * (pt - tt))

    if n_main == 0:  # whole input fits in the tail; nothing for the kernel
        return tail_sq / jnp.float32(n)

    if n_main != n:
        p = p[:n_main]
        t = t[:n_main]

    rows = n_main // LANES                       # multiple of 8
    p2 = p.reshape(rows, LANES)
    t2 = t.reshape(rows, LANES)

    itemsize = jnp.dtype(pred.dtype).itemsize
    # Keep HBM bytes-per-step ~constant across dtypes (~4 MiB per input).
    row_align = SUBLANES * max(1, 4 // itemsize)     # 8 f32 / 16 bf16 / 32 int8
    max_rows = max(row_align,
                   (_MAX_BLOCK_BYTES // (LANES * itemsize)) // row_align * row_align)
    block_rows = min(max_rows, rows)             # rows < max_rows => full-dim block

    num_blocks = pl.cdiv(rows, block_rows)
    shards = max(1, min(_num_tensorcores(), num_blocks))
    bps = pl.cdiv(num_blocks, shards)            # blocks per shard
    last_block = num_blocks - 1
    needs_tail_mask = (rows % block_rows) != 0
    needs_dup_skip = (shards * bps) != num_blocks

    if needs_dup_skip:
        # Clamp so DMA never targets a fully out-of-range block; clamped
        # duplicates are skipped inside the kernel.
        in_map = lambda c, i: (jnp.minimum(c * bps + i, last_block), 0)
    else:
        in_map = lambda c, i: (c * bps + i, 0)
    in_spec = pl.BlockSpec((block_rows, LANES), in_map)
    out_spec = pl.BlockSpec((SUBLANES, LANES), lambda c, i: (c, 0))

    if shards > 1:
        dim_sem = (pltpu.CORE_PARALLEL, pltpu.ARBITRARY)
    else:
        dim_sem = ("arbitrary", "arbitrary")

    out = pl.pallas_call(
        _make_mse_kernel(block_rows, last_block, rows,
                         needs_tail_mask, needs_dup_skip),
        out_shape=jax.ShapeDtypeStruct((shards * SUBLANES, LANES), jnp.float32),
        grid_spec=pltpu.PrefetchScalarGridSpec(
            num_scalar_prefetch=0,
            grid=(shards, bps),
            in_specs=[in_spec, in_spec],
            out_specs=out_spec,
        ),
        compiler_params=pltpu.CompilerParams(
            dimension_semantics=dim_sem,
            vmem_limit_bytes=_VMEM_LIMIT_BYTES,
        ),
        cost_estimate=pl.CostEstimate(
            flops=3 * n_main,
            transcendentals=0,
            bytes_accessed=2 * n_main * itemsize + shards * SUBLANES * LANES * 4,
        ),
    )(p2, t2)

    # Tiny final cross-lane reduce + 1/n scaling done once in the wrapper.
    total = jnp.sum(out)
    if tail_sq is not None:
        total = total + tail_sq
    return total / jnp.float32(n)


class Metric:
    """JAX/Pallas mirror of the PyTorch `Metric` module."""

    def __init__(self):
        # Concrete metric plugged in (reference leaves it as None).
        self.metric = mse_metric

    def __call__(self, pred, target):
        return self.metric(pred, target)


if __name__ == "__main__":
    key = jax.random.PRNGKey(0)
    k1, k2, k3, k4 = jax.random.split(key, 4)

    m = Metric()

    # Primary small NCHW test (1024-aligned, single block).
    pred = jax.random.normal(k1, (2, 4, 16, 16), dtype=jnp.float32)
    target = jax.random.normal(k2, (2, 4, 16, 16), dtype=jnp.float32)
    out = m(pred, target)
    jax.block_until_ready(out)
    ref = jnp.mean((pred - target) ** 2)
    assert jnp.allclose(out, ref, rtol=1e-5, atol=1e-6), (out, ref)

    # Non 1024-aligned size: aligned-prefix kernel + wrapper tail reduction.
    pr = jax.random.normal(k3, (3, 5, 7, 11), dtype=jnp.float32)
    tr = jax.random.normal(k4, (3, 5, 7, 11), dtype=jnp.float32)
    out_r = m(pr, tr)
    ref_r = jnp.mean((pr - tr) ** 2)
    assert jnp.allclose(out_r, ref_r, rtol=1e-5, atol=1e-6), (out_r, ref_r)

    # Multi-block path with a partial (edge-masked) last block.
    pb = jax.random.normal(k1, (2, 4, 512, 260), dtype=jnp.float32)
    tb = jax.random.normal(k2, (2, 4, 512, 260), dtype=jnp.float32)
    out_b = m(pb, tb)
    ref_b = jnp.mean((pb - tb) ** 2)
    assert jnp.allclose(out_b, ref_b, rtol=1e-5, atol=1e-5), (out_b, ref_b)

    # bf16 inputs exercise the native-dtype streaming + dtype-scaled block path.
    ph = pred.astype(jnp.bfloat16)
    th = target.astype(jnp.bfloat16)
    out_h = m(ph, th)
    ref_h = jnp.mean((ph.astype(jnp.float32) - th.astype(jnp.float32)) ** 2)
    assert jnp.allclose(out_h, ref_h, rtol=1e-2, atol=1e-2), (out_h, ref_h)

    jax.block_until_ready((out, out_r, out_b, out_h))
    print("KERNEL_OK")
</pallas_src>

<mosaic_0001>
module attributes {stable_mosaic.version = 11 : i64} {
  func.func @kernel(%arg0: i32, %arg1: i32, %arg2: memref<16x128xf32, #tpu.memory_space<vmem>>, %arg3: memref<16x128xf32, #tpu.memory_space<vmem>>, %arg4: memref<8x128xf32, #tpu.memory_space<vmem>>) attributes {dimension_semantics = [#tpu.dimension_semantics<arbitrary>, #tpu.dimension_semantics<arbitrary>], iteration_bounds = array<i64: 1, 1>, scalar_prefetch = 0 : i64, scratch_operands = 0 : i64, tpu.core_type = #tpu.core_type<tc>, window_params = [{transform_indices = @transform_0, window_bounds = array<i64: 16, 128>}, {transform_indices = @transform_1, window_bounds = array<i64: 16, 128>}, {transform_indices = @transform_2, window_bounds = array<i64: 8, 128>}]} {
    %c0_i32 = arith.constant 0 : i32
    %0 = arith.cmpi eq, %arg1, %c0_i32 : i32
    %1 = arith.extui %0 : i1 to i32
    %c0_i32_0 = arith.constant 0 : i32
    %2 = arith.cmpi ne, %1, %c0_i32_0 : i32
    scf.if %2 {
      %cst_8 = arith.constant 0.000000e+00 : f32
      %12 = vector.broadcast %cst_8 : f32 to vector<8x128xf32>
      %c0_9 = arith.constant 0 : index
      %c0_10 = arith.constant 0 : index
      %13 = vector.load %arg4[%c0_9, %c0_10] : memref<8x128xf32, #tpu.memory_space<vmem>>, vector<8x128xf32>
      tpu.vector_store %arg4[%c0_9, %c0_10], %12 {strides = array<i32>} : memref<8x128xf32, #tpu.memory_space<vmem>>, vector<8x128xf32>,
    } else {
    }
    %c0 = arith.constant 0 : index
    %c0_1 = arith.constant 0 : index
    %3 = vector.load %arg2[%c0, %c0_1] : memref<16x128xf32, #tpu.memory_space<vmem>>, vector<16x128xf32>
    %c0_2 = arith.constant 0 : index
    %c0_3 = arith.constant 0 : index
    %4 = vector.load %arg3[%c0_2, %c0_3] : memref<16x128xf32, #tpu.memory_space<vmem>>, vector<16x128xf32>
    %5 = arith.subf %3, %4 : vector<16x128xf32>
    %6 = arith.mulf %5, %5 : vector<16x128xf32>
    %c0_4 = arith.constant 0 : index
    %c0_5 = arith.constant 0 : index
    %7 = vector.load %arg4[%c0_4, %c0_5] : memref<8x128xf32, #tpu.memory_space<vmem>>, vector<8x128xf32>
    %8 = vector.shape_cast %6 : vector<16x128xf32> to vector<2x8x128xf32>
    %cst = arith.constant dense<0.000000e+00> : vector<8x128xf32>
    %9 = vector.multi_reduction <add>, %8, %cst [0] : vector<2x8x128xf32> to vector<8x128xf32>
    %10 = arith.addf %7, %9 : vector<8x128xf32>
    %c0_6 = arith.constant 0 : index
    %c0_7 = arith.constant 0 : index
    %11 = vector.load %arg4[%c0_6, %c0_7] : memref<8x128xf32, #tpu.memory_space<vmem>>, vector<8x128xf32>
    tpu.vector_store %arg4[%c0_6, %c0_7], %10 {strides = array<i32>} : memref<8x128xf32, #tpu.memory_space<vmem>>, vector<8x128xf32>,
    return
  }
  func.func @transform_0(%arg0: i32, %arg1: i32) -> (i32, i32) {
    %c1_i32 = arith.constant 1 : i32
    %0 = arith.muli %arg0, %c1_i32 : i32
    %1 = arith.addi %0, %arg1 : i32
    %c0_i32 = arith.constant 0 : i32
    %c0_i32_0 = arith.constant 0 : i32
    return %1, %c0_i32 : i32, i32
  }
  func.func @transform_1(%arg0: i32, %arg1: i32) -> (i32, i32) {
    %c1_i32 = arith.constant 1 : i32
    %0 = arith.muli %arg0, %c1_i32 : i32
    %1 = arith.addi %0, %arg1 : i32
    %c0_i32 = arith.constant 0 : i32
    %c0_i32_0 = arith.constant 0 : i32
    return %1, %c0_i32 : i32, i32
  }
  func.func @transform_2(%arg0: i32, %arg1: i32) -> (i32, i32) {
    %c0_i32 = arith.constant 0 : i32
    %c0_i32_0 = arith.constant 0 : i32
    return %arg0, %c0_i32 : i32, i32
  }
}

</mosaic_0001>

<llo_original>
// kernel: tpu_custom_call.1
$region0: #{tpu_custom_call.1}
  #allocation0 [shape = 'u32[]', space=smem, size = 0x4, offset = 0x4, fixed_abs, tag = 'smem constant byte address 0x4 - core index']
  #allocation1 [shape = 'u32[144,128]{1,0:T(1,128)}', space=vmem, size = 0x12000, scoped, tag = 'internal scratch']
  %s0 = inlined_call_operand.hbm [shape: f32[16,128], index: 0, kind: input, shape index: {}]
  %s1 = inlined_call_operand.hbm [shape: f32[16,128], index: 1, kind: input, shape index: {}]
  %s2 = inlined_call_operand.hbm [shape: f32[8,128], index: 2, kind: output, shape index: {}]
  %s3 = sld [smem:[#allocation0]]
  $region30: #{tpu_custom_call.1} parent=0
    _
  %s5 = ssub.s32 1, %s3
  %s6 = scalar_select 0, %s5, %s3
  $region1: #{tpu_custom_call.1} parent=0
    #allocation2 [shape = 'u8[8192]{0}', space=vmem, size = 0x2000, scoped, tag = 'input window, operand 0, single buffered']
    #allocation3 [shape = 's32[1]{0}', space=sflag, size = 0x4, scoped, tag = 'scoped memory for tpu_custom_call.1']
    #allocation4 [shape = 's32[1]{0}', space=sflag, size = 0x4, scoped, tag = 'scoped memory for tpu_custom_call.1']
    #allocation5 [shape = 'u8[8192]{0}', space=vmem, size = 0x2000, scoped, tag = 'input window, operand 1, single buffered']
    #allocation6 [shape = 's32[1]{0}', space=sflag, size = 0x4, scoped, tag = 'scoped memory for tpu_custom_call.1']
    #allocation7 [shape = 'u8[4096]{0}', space=vmem, size = 0x1000, scoped, tag = 'output window, operand 0, single buffered']
    %7 = vsyncpa [#allocation3], 0
    %8 = vsyncpa [#allocation6], 0
    %9 = vsyncpa [#allocation4], 0
    // Predicated region
    $region2: #{tpu_custom_call.1} parent=1 // pred_check
      _
    $region3: #{tpu_custom_call.1} parent=1 // pred_check_branch
      %11 = sbr.rel (0) target = $region5
    $region4: #{tpu_custom_call.1} parent=1 // pred_region
      %s12 = sadd.s32 0, 0
      %s13 = smul.u32 2, %s12
      %s15 = ssub.s32 256, 256
      %16 = vsyncadd [#allocation3], %s15
      %s17 = smul.addr %s13, 128
      %s18 = scalar_lea.hbm %s0, %s17
      %s19 = sshll.u32 [#allocation2], 4
      %s20 = int_to_ptr.vmem [resolvable:$true] %s19
      %25 = dma.hbm_to_vmem [thread:$0]  %s18, 256, %s20, [#allocation3], 128, 128, 8
    $region5: #{tpu_custom_call.1} parent=1 // pred_fallthru
      _
    // Predicated region
    $region6: #{tpu_custom_call.1} parent=1 // pred_check
      _
    $region7: #{tpu_custom_call.1} parent=1 // pred_check_branch
      %27 = sbr.rel (0) target = $region9
    $region8: #{tpu_custom_call.1} parent=1 // pred_region
      %s28 = sadd.s32 0, 0
      %s29 = smul.u32 2, %s28
      %s31 = ssub.s32 256, 256
      %32 = vsyncadd [#allocation6], %s31
      %s33 = smul.addr %s29, 128
      %s34 = scalar_lea.hbm %s1, %s33
      %s35 = sshll.u32 [#allocation5], 4
      %s36 = int_to_ptr.vmem [resolvable:$true] %s35
      %41 = dma.hbm_to_vmem [thread:$0]  %s34, 256, %s36, [#allocation6], 128, 128, 8
    $region9: #{tpu_custom_call.1} parent=1 // pred_fallthru
      _
    // Predicated region
    $region10: #{tpu_custom_call.1} parent=1 // pred_check
      _
    $region11: #{tpu_custom_call.1} parent=1 // pred_check_branch
      %43 = sbr.rel (0) target = $region13
    $region12: #{tpu_custom_call.1} parent=1 // pred_region
      %44 = dma.done [#allocation3], 256
    $region13: #{tpu_custom_call.1} parent=1 // pred_fallthru
      _
    // Predicated region
    $region14: #{tpu_custom_call.1} parent=1 // pred_check
      _
    $region15: #{tpu_custom_call.1} parent=1 // pred_check_branch
      %46 = sbr.rel (0) target = $region17
    $region16: #{tpu_custom_call.1} parent=1 // pred_region
      %47 = dma.done [#allocation6], 256
    $region17: #{tpu_custom_call.1} parent=1 // pred_fallthru
      _
    %s48 = sadd.s32 0, 0
    %s49 = smul.u32 2, %s48
    %s50 = sadd.s32 0, 0
    %s51 = smul.u32 2, %s50
    %p52 = scmp.eq.s32.totalorder 0, 0
    // Predicated region
    $region18: #{tpu_custom_call.1} parent=1 // pred_check
      %p53 = pneg %p52
    $region19: #{tpu_custom_call.1} parent=1 // pred_check_branch
      %55 = sbr.rel (%p53) target = $region21
    $region20: #{tpu_custom_call.1} parent=1 // pred_region
      %56 = vst [vmem:[#allocation7] sm:$0xff] 0.0
    $region21: #{tpu_custom_call.1} parent=1 // pred_fallthru
      _
    %v57 = vld [vmem:[#allocation2] sm:$0xff]
    %v58 = vld [vmem:[#allocation2 + $0x8] sm:$0xff]
    %v59 = vld [vmem:[#allocation5] sm:$0xff]
    %v60 = vld [vmem:[#allocation5 + $0x8] sm:$0xff]
    %v61 = vsub.f32 %v57, %v59
    %v62 = vsub.f32 %v58, %v60
    %v63 = vmul.f32 %v61, %v61
    %v64 = vmul.f32 %v62, %v62
    %v65 = vld [vmem:[#allocation7] sm:$0xff]
    %v66 = vadd.f32 %v63, %v64
    %v67 = vadd.f32 %v65, %v66
    %68 = vst [vmem:[#allocation7] sm:$0xff] %v67
    // Predicated region
    $region22: #{tpu_custom_call.1} parent=1 // pred_check
      _
    $region23: #{tpu_custom_call.1} parent=1 // pred_check_branch
      %70 = sbr.rel (0) target = $region25
    $region24: #{tpu_custom_call.1} parent=1 // pred_region
      %s72 = ssub.s32 128, 128
      %73 = vsyncadd [#allocation4], %s72
      %s75 = sshll.u32 [#allocation7], 4
      %s76 = int_to_ptr.vmem [resolvable:$true] %s75
      %78 = dma.vmem_to_hbm [thread:$0]  %s76, 128, %s2, [#allocation4]
    $region25: #{tpu_custom_call.1} parent=1 // pred_fallthru
      _
    // Predicated region
    $region26: #{tpu_custom_call.1} parent=1 // pred_check
      _
    $region27: #{tpu_custom_call.1} parent=1 // pred_check_branch
      %80 = sbr.rel (0) target = $region29
    $region28: #{tpu_custom_call.1} parent=1 // pred_region
      %81 = dma.done [#allocation4], 128
    $region29: #{tpu_custom_call.1} parent=1 // pred_fallthru
      _
    %82 = vsyncpa [#allocation3], 1
    %83 = vsyncpa [#allocation6], 1
    %84 = vsyncpa [#allocation4], 1

</llo_original>
